<compile_context>
chip_gen: v5e
topology: v5e:2x2
jax: 0.10.0
libtpu: 0.0.40
codegen_flags: <defaults>
</compile_context>

<pallas_src>
import functools

import jax
import jax.numpy as jnp
from jax.experimental import pallas as pl
from jax.experimental.pallas import tpu as pltpu


def _round_up(n, m):
    return (n + m - 1) // m * m


def _default_lane():
    """Pad/tile granularity for the N (output-feature) axis of hidden layers.

    v6e/v7x MXUs are 256 wide -> 256-multiples fill the systolic array;
    v5e's MXU is 4x128x128 -> 128 is already optimal there.
    """
    try:
        kind = jax.devices()[0].device_kind.lower()
    except Exception:  # pragma: no cover - device query should not be fatal
        return 128
    if "v6" in kind or "v7" in kind or "tpu7" in kind:
        return 256
    return 128


def _pick_block_m(batch):
    """Batch tile: prefer >=256 rows (fills MXU rows on v6e/v7x), must divide
    the batch and respect the (8,128) sublane rule; tiny/odd batches fall back
    to a single full-batch block (block == full dim is always legal)."""
    for cand in (512, 256, 128, 64, 32, 16, 8):
        if batch % cand == 0:
            return cand
    return batch


def _fused_mlp_kernel(*refs, n_layers, compute_dtype):
    """Entire MLP in one kernel body.

    refs = (x_ref, w0_ref, b0_ref, w1_ref, b1_ref, ..., o_ref)
      x_ref : (block_m, D0)      VMEM  (true, unpadded input width)
      wj_ref: (Kj_pad, Nj_pad)   VMEM  (pre-transposed; zero-padded, compute_dtype)
      bj_ref: (1, Nj_pad)        VMEM  (f32, zero-padded)
      o_ref : (block_m, D_out)   VMEM  (true output width -> no wrapper slice)

    The activation `h` stays in vregs/VMEM between layers; bias-add (VPU) and
    tanh (EUP) co-issue under the MXU critical path.  Padded hidden lanes stay
    exactly zero: padded W columns/rows and bias lanes are zero and tanh(0)==0.
    """
    x_ref = refs[0]
    o_ref = refs[1 + 2 * n_layers]
    h = x_ref[...]
    for j in range(n_layers):
        w_ref = refs[1 + 2 * j]
        b_ref = refs[2 + 2 * j]
        # MXU matmul with f32 accumulation (bf16 operands when compute_dtype=bf16).
        h = jnp.dot(h.astype(compute_dtype), w_ref[...],
                    preferred_element_type=jnp.float32) + b_ref[...]
        if j < n_layers - 1:          # hidden layers -> Tanh, last -> Identity
            h = jnp.tanh(h)
    o_ref[...] = h.astype(o_ref.dtype)


def prepare_params(params, lane=None, compute_dtype=jnp.float32):
    """One-time (init-time) prep of PyTorch-convention (out,in) params.

    - transpose weight (out, in) -> (in, out) so the kernel computes y = x @ W_t
    - hidden (inter-layer) widths zero-padded to `lane` multiples (lane-dense
      MXU tiles); each next layer's K axis padded to match with explicit zeros
    - first-layer K and last-layer N keep their TRUE sizes so x needs no pad
      and the output needs no slice
    - weights stored in `compute_dtype` (bf16 recommended at scale); biases f32
    """
    if lane is None:
        lane = _default_lane()
    n = len(params)
    prepared = []
    prev_pad = None
    for j, (w, b) in enumerate(params):
        w = jnp.asarray(w, jnp.float32)
        b = jnp.asarray(b, jnp.float32)
        out_dim, in_dim = w.shape
        in_p = in_dim if j == 0 else prev_pad              # K matches prev layer
        out_p = out_dim if j == n - 1 else _round_up(out_dim, lane)
        w_t = jnp.zeros((in_p, out_p), jnp.float32).at[:in_dim, :out_dim].set(w.T)
        b_p = jnp.zeros((1, out_p), jnp.float32).at[0, :out_dim].set(b)
        prepared.append((w_t.astype(compute_dtype), b_p))
        prev_pad = out_p
    return prepared


def _mlp_forward(x, prepared):
    """Fused forward pass: one pallas_call for the whole MLP. No wrapper pad/slice."""
    batch, in_dim = x.shape
    n_layers = len(prepared)
    out_dim = prepared[-1][0].shape[1]
    compute_dtype = prepared[0][0].dtype

    block_m = _pick_block_m(batch)
    grid_m = batch // block_m

    operands = [x]
    in_specs = [pl.BlockSpec((block_m, in_dim), lambda i: (i, 0))]
    for w_t, b in prepared:
        operands += [w_t, b]
        # Constant index_map -> weights/bias stay resident in VMEM across the grid.
        in_specs += [
            pl.BlockSpec(w_t.shape, lambda i: (0, 0)),
            pl.BlockSpec(b.shape, lambda i: (0, 0)),
        ]
    out_specs = pl.BlockSpec((block_m, out_dim), lambda i: (i, 0))

    flops = 2 * sum(batch * w.shape[0] * w.shape[1] for w, _ in prepared)
    transcendentals = sum(batch * w.shape[1] for w, _ in prepared[:-1])
    bytes_accessed = (
        x.size * x.dtype.itemsize
        + sum(w.size * w.dtype.itemsize + b.size * b.dtype.itemsize
              for w, b in prepared)
        + batch * out_dim * 4
    )

    kernel = functools.partial(
        _fused_mlp_kernel, n_layers=n_layers, compute_dtype=compute_dtype)

    return pl.pallas_call(
        kernel,
        out_shape=jax.ShapeDtypeStruct((batch, out_dim), jnp.float32),
        grid=(grid_m,),
        in_specs=in_specs,
        out_specs=out_specs,
        compiler_params=pltpu.CompilerParams(
            # Batch axis is independent -> shards across v7x's 2 TensorCores
            # when grid_m > 1; no-op on single-TC v5e/v6e.
            dimension_semantics=("parallel",),
        ),
        cost_estimate=pl.CostEstimate(
            flops=flops,
            transcendentals=transcendentals,
            bytes_accessed=bytes_accessed,
        ),
    )(*operands)


# Single dispatch for the whole forward pass.
mlp_forward = jax.jit(_mlp_forward)


def init_mlp_params(key, sizes):
    """Deterministic init matching nn.Linear default (U(-1/sqrt(in), 1/sqrt(in)))."""
    params = []
    for j in range(len(sizes) - 1):
        fan_in, fan_out = sizes[j], sizes[j + 1]
        key, kw, kb = jax.random.split(key, 3)
        bound = 1.0 / jnp.sqrt(jnp.float32(fan_in))
        w = jax.random.uniform(kw, (fan_out, fan_in), jnp.float32, -bound, bound)
        b = jax.random.uniform(kb, (fan_out,), jnp.float32, -bound, bound)
        params.append((w, b))
    return params


if __name__ == "__main__":
    # Small MLP: sizes = [16, 32, 8] (obs_dim=16, hidden=32, act_dim=8), batch=4.
    sizes = [16, 32, 8]
    batch = 4

    key = jax.random.PRNGKey(0)
    key, kx = jax.random.split(key)
    x = jax.random.normal(kx, (batch, sizes[0]), dtype=jnp.float32)
    params = init_mlp_params(key, sizes)

    # Pure-JAX reference (Linear -> Tanh -> Linear -> Identity).
    ref = x
    for j, (w, b) in enumerate(params):
        ref = ref @ w.T + b
        if j < len(params) - 1:
            ref = jnp.tanh(ref)

    # --- f32 path (strict check) -------------------------------------------
    prepared_f32 = prepare_params(params, compute_dtype=jnp.float32)
    out = jax.block_until_ready(mlp_forward(x, prepared_f32))
    assert out.shape == (batch, sizes[-1])
    assert jnp.allclose(out, ref, atol=1e-5, rtol=1e-5)

    # --- bf16-operand path (f32 accumulation; loosened tolerance) -----------
    prepared_bf16 = prepare_params(params, compute_dtype=jnp.bfloat16)
    out_bf16 = jax.block_until_ready(mlp_forward(x, prepared_bf16))
    assert out_bf16.shape == (batch, sizes[-1])
    assert jnp.allclose(out_bf16, ref, atol=5e-2, rtol=0)

    print("KERNEL_OK")
</pallas_src>

<mosaic_0001>
module attributes {stable_mosaic.version = 11 : i64} {
  func.func @_fused_mlp_kernel(%arg0: i32, %arg1: memref<4x16xf32, #tpu.memory_space<vmem>>, %arg2: memref<16x128xf32, #tpu.memory_space<vmem>>, %arg3: memref<1x128xf32, #tpu.memory_space<vmem>>, %arg4: memref<128x8xf32, #tpu.memory_space<vmem>>, %arg5: memref<1x8xf32, #tpu.memory_space<vmem>>, %arg6: memref<4x8xf32, #tpu.memory_space<vmem>>) attributes {dimension_semantics = [#tpu.dimension_semantics<parallel>], iteration_bounds = array<i64: 1>, scalar_prefetch = 0 : i64, scratch_operands = 0 : i64, tpu.core_type = #tpu.core_type<tc>, window_params = [{transform_indices = @transform_0, window_bounds = array<i64: 4, 16>}, {pipeline_mode = #tpu.pipeline_mode<synchronous>, transform_indices = @transform_1, window_bounds = array<i64: 16, 128>}, {pipeline_mode = #tpu.pipeline_mode<synchronous>, transform_indices = @transform_2, window_bounds = array<i64: 1, 128>}, {pipeline_mode = #tpu.pipeline_mode<synchronous>, transform_indices = @transform_3, window_bounds = array<i64: 128, 8>}, {pipeline_mode = #tpu.pipeline_mode<synchronous>, transform_indices = @transform_4, window_bounds = array<i64: 1, 8>}, {transform_indices = @transform_5, window_bounds = array<i64: 4, 8>}]} {
    %c0 = arith.constant 0 : index
    %c0_0 = arith.constant 0 : index
    %0 = vector.load %arg1[%c0, %c0_0] : memref<4x16xf32, #tpu.memory_space<vmem>>, vector<4x16xf32>
    %c0_1 = arith.constant 0 : index
    %c0_2 = arith.constant 0 : index
    %1 = vector.load %arg2[%c0_1, %c0_2] : memref<16x128xf32, #tpu.memory_space<vmem>>, vector<16x128xf32>
    %cst = arith.constant dense<0.000000e+00> : vector<4x128xf32>
    %2 = tpu.matmul %0, %1, %cst {dimension_numbers = #tpu.dot_dimension_numbers<[1], [0], [0], [1], [0, 0, 1, 1], [], []>} : vector<4x16xf32>, vector<16x128xf32>, vector<4x128xf32> -> vector<4x128xf32>
    %c0_3 = arith.constant 0 : index
    %c0_4 = arith.constant 0 : index
    %3 = vector.load %arg3[%c0_3, %c0_4] : memref<1x128xf32, #tpu.memory_space<vmem>>, vector<1x128xf32>
    %4 = vector.broadcast %3 : vector<1x128xf32> to vector<4x128xf32>
    %5 = arith.addf %2, %4 : vector<4x128xf32>
    %6 = math.tanh %5 : vector<4x128xf32>
    %c0_5 = arith.constant 0 : index
    %c0_6 = arith.constant 0 : index
    %7 = vector.load %arg4[%c0_5, %c0_6] : memref<128x8xf32, #tpu.memory_space<vmem>>, vector<128x8xf32>
    %cst_7 = arith.constant dense<0.000000e+00> : vector<4x8xf32>
    %8 = tpu.matmul %6, %7, %cst_7 {dimension_numbers = #tpu.dot_dimension_numbers<[1], [0], [0], [1], [0, 0, 1, 1], [], []>} : vector<4x128xf32>, vector<128x8xf32>, vector<4x8xf32> -> vector<4x8xf32>
    %c0_8 = arith.constant 0 : index
    %c0_9 = arith.constant 0 : index
    %9 = vector.load %arg5[%c0_8, %c0_9] : memref<1x8xf32, #tpu.memory_space<vmem>>, vector<1x8xf32>
    %10 = vector.broadcast %9 : vector<1x8xf32> to vector<4x8xf32>
    %11 = arith.addf %8, %10 : vector<4x8xf32>
    %c0_10 = arith.constant 0 : index
    %c0_11 = arith.constant 0 : index
    %12 = vector.load %arg6[%c0_10, %c0_11] : memref<4x8xf32, #tpu.memory_space<vmem>>, vector<4x8xf32>
    tpu.vector_store %arg6[%c0_10, %c0_11], %11 {strides = array<i32>} : memref<4x8xf32, #tpu.memory_space<vmem>>, vector<4x8xf32>,
    return
  }
  func.func @transform_0(%arg0: i32) -> (i32, i32) {
    %c0_i32 = arith.constant 0 : i32
    %c0_i32_0 = arith.constant 0 : i32
    return %arg0, %c0_i32 : i32, i32
  }
  func.func @transform_1(%arg0: i32) -> (i32, i32) {
    %c0_i32 = arith.constant 0 : i32
    %c0_i32_0 = arith.constant 0 : i32
    %c0_i32_1 = arith.constant 0 : i32
    return %c0_i32, %c0_i32_0 : i32, i32
  }
  func.func @transform_2(%arg0: i32) -> (i32, i32) {
    %c0_i32 = arith.constant 0 : i32
    %c0_i32_0 = arith.constant 0 : i32
    %c0_i32_1 = arith.constant 0 : i32
    return %c0_i32, %c0_i32_0 : i32, i32
  }
  func.func @transform_3(%arg0: i32) -> (i32, i32) {
    %c0_i32 = arith.constant 0 : i32
    %c0_i32_0 = arith.constant 0 : i32
    %c0_i32_1 = arith.constant 0 : i32
    return %c0_i32, %c0_i32_0 : i32, i32
  }
  func.func @transform_4(%arg0: i32) -> (i32, i32) {
    %c0_i32 = arith.constant 0 : i32
    %c0_i32_0 = arith.constant 0 : i32
    %c0_i32_1 = arith.constant 0 : i32
    return %c0_i32, %c0_i32_0 : i32, i32
  }
  func.func @transform_5(%arg0: i32) -> (i32, i32) {
    %c0_i32 = arith.constant 0 : i32
    %c0_i32_0 = arith.constant 0 : i32
    return %arg0, %c0_i32 : i32, i32
  }
}

</mosaic_0001>

<llo_original>
// kernel: _mlp_forward.1
$region0: #{_mlp_forward.1}
  #allocation0 [shape = 'u32[]', space=smem, size = 0x4, offset = 0x4, fixed_abs, tag = 'smem constant byte address 0x4 - core index']
  #allocation1 [shape = 'u32[72,128]{1,0:T(1,128)}', space=vmem, size = 0x9000, scoped, tag = 'internal scratch']
  %s0 = inlined_call_operand.vmem [shape: f32[4,16], index: 0, kind: input, shape index: {}]
  %s1 = inlined_call_operand.vmem [shape: f32[16,128], index: 1, kind: input, shape index: {}]
  %s2 = inlined_call_operand.vmem [shape: f32[1,128], index: 2, kind: input, shape index: {}]
  %s3 = inlined_call_operand.vmem [shape: f32[128,8], index: 3, kind: input, shape index: {}]
  %s4 = inlined_call_operand.vmem [shape: f32[1,8], index: 4, kind: input, shape index: {}]
  %s5 = inlined_call_operand.hbm [shape: f32[4,8], index: 5, kind: output, shape index: {}]
  %s6 = sld [smem:[#allocation0]]
  $region30: #{_mlp_forward.1} parent=0
    _
  %s8 = ssub.s32 1, %s6
  %s9 = scalar_select 0, %s8, %s6
  $region1: #{_mlp_forward.1} parent=0
    #allocation2 [shape = 'u8[2048]{0}', space=vmem, size = 0x800, scoped, tag = 'output window, operand 0, single buffered']
    #allocation3 [shape = 's32[1]{0}', space=sflag, size = 0x4, scoped, tag = 'scoped memory for _mlp_forward.1']
    %10 = vsyncpa [#allocation3], 0
    // Predicated region
    $region2: #{_mlp_forward.1} parent=1 // pred_check
      _
    $region3: #{_mlp_forward.1} parent=1 // pred_check_branch
      %12 = sbr.rel (0) target = $region5
    $region4: #{_mlp_forward.1} parent=1 // pred_region
      _
    $region5: #{_mlp_forward.1} parent=1 // pred_fallthru
      _
    // Predicated region
    $region6: #{_mlp_forward.1} parent=1 // pred_check
      _
    $region7: #{_mlp_forward.1} parent=1 // pred_check_branch
      %14 = sbr.rel (0) target = $region9
    $region8: #{_mlp_forward.1} parent=1 // pred_region
      _
    $region9: #{_mlp_forward.1} parent=1 // pred_fallthru
      _
    // Predicated region
    $region10: #{_mlp_forward.1} parent=1 // pred_check
      _
    $region11: #{_mlp_forward.1} parent=1 // pred_check_branch
      %16 = sbr.rel (0) target = $region13
    $region12: #{_mlp_forward.1} parent=1 // pred_region
      _
    $region13: #{_mlp_forward.1} parent=1 // pred_fallthru
      _
    // Predicated region
    $region14: #{_mlp_forward.1} parent=1 // pred_check
      _
    $region15: #{_mlp_forward.1} parent=1 // pred_check_branch
      %18 = sbr.rel (0) target = $region17
    $region16: #{_mlp_forward.1} parent=1 // pred_region
      _
    $region17: #{_mlp_forward.1} parent=1 // pred_fallthru
      _
    // Predicated region
    $region18: #{_mlp_forward.1} parent=1 // pred_check
      _
    $region19: #{_mlp_forward.1} parent=1 // pred_check_branch
      %20 = sbr.rel (0) target = $region21
    $region20: #{_mlp_forward.1} parent=1 // pred_region
      _
    $region21: #{_mlp_forward.1} parent=1 // pred_fallthru
      _
    %v21 = vld [vmem:[%s0] sm:$0xf]
    %v22 = vld [vmem:[%s1] sm:$0xff]
    %v23 = vld [vmem:[%s1 + $0x8] sm:$0xff]
    %v24 = vld [vmem:[%s2] sm:$0x1]
    %v26 = vperm.slane %v24, 0
    %vm28 = vcmask 130048
    %v30 = vsel %vm28, %v21, 0
    %32 = vmatpush.msra.mxu0 0.0
    %33 = vmatpush.msra.mxu0 0.0
    %34 = vmatpush.msra.mxu0 0.0
    %35 = vmatpush.msra.mxu0 0.0
    %36 = vmatpush.msra.mxu0 0.0
    %37 = vmatpush.msra.mxu0 0.0
    %38 = vmatpush.msra.mxu0 0.0
    %39 = vmatpush.msra.mxu0 0.0
    %40 = vmatpush.msra.mxu0 0.0
    %41 = vmatpush.msra.mxu0 0.0
    %42 = vmatpush.msra.mxu0 0.0
    %43 = vmatpush.msra.mxu0 0.0
    %44 = vmatpush.msra.mxu0 0.0
    %45 = vmatpush.msra.mxu0 0.0
    %46 = vmatpush.msra.mxu0 %v23
    %47 = vmatpush.msra.mxu0 %v22
    %48 = vmatmul.f32.gmra.mxu0 %v30
    %v49 = vpop.f32.mrf.mxu0
    %v50 = vadd.f32 %v26, %v49
    %51 = vdwg.mxu0
    %v52 = vtanh.pop %v50
    %v53 = vld [vmem:[%s3] sm:$0xff]
    %v54 = vld [vmem:[%s3 + $0x8] sm:$0xff]
    %v55 = vld [vmem:[%s3 + $0x10] sm:$0xff]
    %v56 = vld [vmem:[%s3 + $0x18] sm:$0xff]
    %v57 = vld [vmem:[%s3 + $0x20] sm:$0xff]
    %v58 = vld [vmem:[%s3 + $0x28] sm:$0xff]
    %v59 = vld [vmem:[%s3 + $0x30] sm:$0xff]
    %v60 = vld [vmem:[%s3 + $0x38] sm:$0xff]
    %v61 = vld [vmem:[%s3 + $0x40] sm:$0xff]
    %v62 = vld [vmem:[%s3 + $0x48] sm:$0xff]
    %v63 = vld [vmem:[%s3 + $0x50] sm:$0xff]
    %v64 = vld [vmem:[%s3 + $0x58] sm:$0xff]
    %v65 = vld [vmem:[%s3 + $0x60] sm:$0xff]
    %v66 = vld [vmem:[%s3 + $0x68] sm:$0xff]
    %v67 = vld [vmem:[%s3 + $0x70] sm:$0xff]
    %v68 = vld [vmem:[%s3 + $0x78] sm:$0xff]
    %v69 = vld [vmem:[%s4] sm:$0x1]
    %v71 = vperm.slane %v69, 0
    %73 = vmatpush.msra.mxu0 %v68
    %74 = vmatpush.msra.mxu0 %v67
    %75 = vmatpush.msra.mxu0 %v66
    %76 = vmatpush.msra.mxu0 %v65
    %77 = vmatpush.msra.mxu0 %v64
    %78 = vmatpush.msra.mxu0 %v63
    %79 = vmatpush.msra.mxu0 %v62
    %80 = vmatpush.msra.mxu0 %v61
    %81 = vmatpush.msra.mxu0 %v60
    %82 = vmatpush.msra.mxu0 %v59
    %83 = vmatpush.msra.mxu0 %v58
    %84 = vmatpush.msra.mxu0 %v57
    %85 = vmatpush.msra.mxu0 %v56
    %86 = vmatpush.msra.mxu0 %v55
    %87 = vmatpush.msra.mxu0 %v54
    %88 = vmatpush.msra.mxu0 %v53
    %89 = vmatmul.f32.gmra.mxu0 %v52
    %v90 = vpop.f32.mrf.mxu0
    %v91 = vadd.f32 %v71, %v90
    %92 = vdwg.mxu0
    %vm93 = vcmask 60416
    %94 = vst.msk [vmem:[#allocation2] sm:$0xf] %vm93, %v91
    // Predicated region
    $region22: #{_mlp_forward.1} parent=1 // pred_check
      _
    $region23: #{_mlp_forward.1} parent=1 // pred_check_branch
      %96 = sbr.rel (0) target = $region25
    $region24: #{_mlp_forward.1} parent=1 // pred_region
      %98 = vsyncadd [#allocation3], 0
      %s100 = sshll.u32 [#allocation2], 4
      %s101 = int_to_ptr.vmem [resolvable:$true] %s100
      %s102 = sshll.u32 %s5, 4
      %s103 = int_to_ptr.hbm [resolvable:$true] %s102
      %105 = dma.vmem_to_hbm [thread:$0]  %s101, 64, %s103, [#allocation3]
    $region25: #{_mlp_forward.1} parent=1 // pred_fallthru
      _
    // Predicated region
    $region26: #{_mlp_forward.1} parent=1 // pred_check
      _
    $region27: #{_mlp_forward.1} parent=1 // pred_check_branch
      %107 = sbr.rel (0) target = $region29
    $region28: #{_mlp_forward.1} parent=1 // pred_region
      %109 = dma.done [#allocation3], 64
    $region29: #{_mlp_forward.1} parent=1 // pred_fallthru
      _
    %110 = vsyncpa [#allocation3], 1

</llo_original>
